<compile_context>
chip_gen: v7x
topology: tpu7x:2x2x1
jax: 0.10.0
libtpu: 0.0.40
codegen_flags: <defaults>
</compile_context>

<pallas_src>
import math
import functools

import jax
import jax.numpy as jnp
from jax.experimental import pallas as pl
from jax.experimental.pallas import tpu as pltpu

_MIB = 1024 * 1024


def _gelu_tanh(x):
    # PyTorch nn.GELU(approximate='tanh'):
    #   0.5 * x * (1 + tanh(sqrt(2/pi) * (x + 0.044715 * x^3)))
    # Cubic factored as x*(1 + 0.044715*x*x): one fewer VPU multiply (v5e micro-opt);
    # tanh goes to the EUP slot.
    c = math.sqrt(2.0 / math.pi)
    return 0.5 * x * (1.0 + jnp.tanh(c * (x * (1.0 + 0.044715 * (x * x)))))


# --------------------------------------------------------------------------
# Kernels
# --------------------------------------------------------------------------

def _ffn_resident_kernel(x_ref, w1_ref, b1_ref, w2_ref, b2_ref, o_ref):
    # Weight-resident path.  Grid: (token_tiles,).
    # x_ref : (tm, model_dim)        token tile (streams)
    # w1_ref: (model_dim, ff_dim)    full expand weight (resident, const index)
    # b1_ref: (1, ff_dim)
    # w2_ref: (ff_dim, model_dim)    full shrink weight (resident, const index)
    # b2_ref: (1, model_dim)
    # o_ref : (tm, model_dim)
    h = jnp.dot(x_ref[...], w1_ref[...], preferred_element_type=jnp.float32)
    h = _gelu_tanh(h + b1_ref[...].astype(jnp.float32))
    # Dropout: identity in inference mode.
    # TODO(synk): training-mode dropout (pltpu.prng_*) not implemented.
    y = jnp.dot(h.astype(w2_ref.dtype), w2_ref[...],
                preferred_element_type=jnp.float32)
    o_ref[...] = (y + b2_ref[...].astype(jnp.float32)).astype(o_ref.dtype)


def _ffn_streamed_kernel(x_ref, w1_ref, b1_ref, w2_ref, b2_ref, o_ref, acc_ref):
    # Streamed-weight fallback.  Grid: (token_tiles, ff_tiles); ff is the
    # reduction axis (last, "arbitrary").
    # x_ref : (tm, model_dim)   token tile (resident across the ff loop)
    # w1_ref: (model_dim, tf)   expand-weight slice
    # b1_ref: (1, tf)
    # w2_ref: (tf, model_dim)   shrink-weight slice
    # b2_ref: (1, model_dim)
    # acc_ref: (tm, model_dim) f32 VMEM accumulator
    f = pl.program_id(1)

    @pl.when(f == 0)
    def _():
        acc_ref[...] = jnp.zeros_like(acc_ref)

    h = jnp.dot(x_ref[...], w1_ref[...], preferred_element_type=jnp.float32)
    h = _gelu_tanh(h + b1_ref[...].astype(jnp.float32))
    # Dropout: identity in inference mode.
    # TODO(synk): training-mode dropout (pltpu.prng_*) not implemented.
    acc_ref[...] += jnp.dot(h.astype(w2_ref.dtype), w2_ref[...],
                            preferred_element_type=jnp.float32)

    @pl.when(f == pl.num_programs(1) - 1)
    def _():
        o_ref[...] = (acc_ref[...]
                      + b2_ref[...].astype(jnp.float32)).astype(o_ref.dtype)


# --------------------------------------------------------------------------
# Tiling / VMEM budgeting helpers
# --------------------------------------------------------------------------

def _round_up(x, m):
    return ((x + m - 1) // m) * m


def _pick_token_tile(tokens, requested):
    """Token tile (second-to-last block dim).

    Multiple of 128 (MXU-friendly) when tiling; for tiny inputs the block spans
    the whole token axis.  When tokens allow, produce >= 2 token tiles so the
    'parallel' token axis can shard across both v7x TensorCores.
    """
    requested = max(128, _round_up(requested, 128))
    if tokens < 256:
        return tokens                                   # single full-extent tile
    if tokens <= requested:
        return _round_up(pl.cdiv(tokens, 2), 128)       # >= 2 tiles for megacore
    return requested


def _pick_ff_tile(ff_dim, requested):
    """Largest divisor of ff_dim that is a multiple of 128 and <= requested."""
    if ff_dim % 128 != 0:
        return ff_dim  # no tiling; block equals full dim (allowed)
    tf = min(requested, ff_dim)
    tf -= tf % 128
    tf = max(tf, 128)
    while ff_dim % tf != 0:
        tf -= 128
    return tf


def _dtype_bytes(dt):
    return jnp.dtype(dt).itemsize


def _vmem_capacity_bytes():
    try:
        cap = getattr(pltpu.get_tpu_info(), "vmem_capacity_bytes", None)
        if cap:
            return int(cap)
    except Exception:
        pass
    return 64 * _MIB  # conservative default = v7x per-TensorCore VMEM


def _resident_vmem_bytes(tm, model_dim, ff_dim, x_dt, w_dt, o_dt):
    wb = _dtype_bytes(w_dt)
    weights = 2 * 2 * model_dim * ff_dim * wb        # x2: possible double-buffering
    biases = 2 * 2 * (ff_dim + model_dim) * wb
    x_tiles = 2 * tm * model_dim * _dtype_bytes(x_dt)
    o_tiles = 2 * tm * model_dim * _dtype_bytes(o_dt)
    h_tmp = tm * ff_dim * 4                          # f32 GELU intermediate
    y_tmp = tm * model_dim * 4
    return weights + biases + x_tiles + o_tiles + h_tmp + y_tmp


def _streamed_vmem_bytes(tm, tf, model_dim, x_dt, w_dt, o_dt):
    wb = _dtype_bytes(w_dt)
    w_slices = 3 * (model_dim * tf + tf * model_dim) * wb   # Buffered(3)
    biases = 3 * tf * wb + 2 * model_dim * wb
    x_tiles = 2 * tm * model_dim * _dtype_bytes(x_dt)
    o_tiles = 2 * tm * model_dim * _dtype_bytes(o_dt)
    acc = tm * model_dim * 4
    h_tmp = tm * tf * 4
    return w_slices + biases + x_tiles + o_tiles + acc + h_tmp


# --------------------------------------------------------------------------
# Wrapper
# --------------------------------------------------------------------------

@functools.partial(jax.jit, static_argnames=("tm", "ff_tile", "force_streamed"))
def feed_forward(x, w1, b1, w2, b2, *, tm=512, ff_tile=1024, force_streamed=False):
    """y = shrink(dropout(gelu_tanh(expand(x)))), dropout = identity (inference).

    x : (batch, seq, model_dim) -> (batch, seq, model_dim)
    w1: (model_dim, ff_dim), b1: (ff_dim,)
    w2: (ff_dim, model_dim), b2: (model_dim,)
    """
    batch, seq, model_dim = x.shape
    ff_dim = w1.shape[1]
    tokens = batch * seq

    # Flatten activations (no host pad / slice round trip: partial last token
    # block is handled by Pallas; garbage padded rows are never written back).
    x2d = x.reshape(tokens, model_dim)
    b1r = b1.reshape(1, ff_dim)
    b2r = b2.reshape(1, model_dim)

    tm_eff = _pick_token_tile(tokens, tm)
    n_token_tiles = pl.cdiv(tokens, tm_eff)

    capacity = _vmem_capacity_bytes()
    budget = int(0.75 * capacity)

    flops = 4 * tokens * model_dim * ff_dim
    transcendentals = tokens * ff_dim
    nbytes = lambda a: a.size * a.dtype.itemsize

    resident_bytes = _resident_vmem_bytes(
        tm_eff, model_dim, ff_dim, x.dtype, w1.dtype, x.dtype)
    use_resident = (not force_streamed) and (resident_bytes <= budget)

    if use_resident:
        vmem_limit = min(int(0.90 * capacity),
                         max(32 * _MIB, int(1.25 * resident_bytes)))
        cost = pl.CostEstimate(
            flops=flops, transcendentals=transcendentals,
            bytes_accessed=(nbytes(x2d) * 2 + nbytes(w1) + nbytes(w2)
                            + nbytes(b1r) + nbytes(b2r)))
        out = pl.pallas_call(
            _ffn_resident_kernel,
            out_shape=jax.ShapeDtypeStruct((tokens, model_dim), x.dtype),
            grid_spec=pltpu.PrefetchScalarGridSpec(
                num_scalar_prefetch=0,
                grid=(n_token_tiles,),
                in_specs=[
                    pl.BlockSpec((tm_eff, model_dim), lambda i: (i, 0)),   # x tile
                    pl.BlockSpec((model_dim, ff_dim), lambda i: (0, 0)),   # W1 resident
                    pl.BlockSpec((1, ff_dim), lambda i: (0, 0)),           # b1
                    pl.BlockSpec((ff_dim, model_dim), lambda i: (0, 0)),   # W2 resident
                    pl.BlockSpec((1, model_dim), lambda i: (0, 0)),        # b2
                ],
                out_specs=pl.BlockSpec((tm_eff, model_dim), lambda i: (i, 0)),
            ),
            compiler_params=pltpu.CompilerParams(
                dimension_semantics=("parallel",),
                vmem_limit_bytes=vmem_limit),
            cost_estimate=cost,
        )(x2d, w1, b1r, w2, b2r)
    else:
        tf = _pick_ff_tile(ff_dim, ff_tile)
        streamed_bytes = _streamed_vmem_bytes(
            tm_eff, tf, model_dim, x.dtype, w1.dtype, x.dtype)
        vmem_limit = min(int(0.90 * capacity),
                         max(32 * _MIB, int(1.25 * streamed_bytes)))
        cost = pl.CostEstimate(
            flops=flops, transcendentals=transcendentals,
            bytes_accessed=(nbytes(x2d) * 2
                            + n_token_tiles * (nbytes(w1) + nbytes(w2) + nbytes(b1r))
                            + nbytes(b2r)))
        out = pl.pallas_call(
            _ffn_streamed_kernel,
            out_shape=jax.ShapeDtypeStruct((tokens, model_dim), x.dtype),
            grid_spec=pltpu.PrefetchScalarGridSpec(
                num_scalar_prefetch=0,
                grid=(n_token_tiles, ff_dim // tf),
                in_specs=[
                    pl.BlockSpec((tm_eff, model_dim), lambda i, f: (i, 0)),  # x tile
                    pl.BlockSpec((model_dim, tf), lambda i, f: (0, f),       # W1 slice
                                 pipeline_mode=pl.Buffered(3)),
                    pl.BlockSpec((1, tf), lambda i, f: (0, f)),              # b1 slice
                    pl.BlockSpec((tf, model_dim), lambda i, f: (f, 0),       # W2 slice
                                 pipeline_mode=pl.Buffered(3)),
                    pl.BlockSpec((1, model_dim), lambda i, f: (0, 0)),       # b2
                ],
                out_specs=pl.BlockSpec((tm_eff, model_dim), lambda i, f: (i, 0)),
                scratch_shapes=[pltpu.VMEM((tm_eff, model_dim), jnp.float32)],
            ),
            compiler_params=pltpu.CompilerParams(
                dimension_semantics=("parallel", "arbitrary"),
                vmem_limit_bytes=vmem_limit),
            cost_estimate=cost,
        )(x2d, w1, b1r, w2, b2r)

    return out.reshape(batch, seq, model_dim)


# --------------------------------------------------------------------------
# Reference + demo
# --------------------------------------------------------------------------

def _init_linear(key, fan_in, fan_out, dtype=jnp.float32):
    # Mimic torch.nn.Linear default init: U(-1/sqrt(fan_in), 1/sqrt(fan_in)).
    kw, kb = jax.random.split(key)
    bound = 1.0 / math.sqrt(fan_in)
    # Stored as (fan_in, fan_out) so the kernel does x @ W directly
    # (PyTorch stores weight as (out, in) and computes x @ W.T — same math).
    w = jax.random.uniform(kw, (fan_in, fan_out), dtype, -bound, bound)
    b = jax.random.uniform(kb, (fan_out,), dtype, -bound, bound)
    return w, b


def _reference(x, w1, b1, w2, b2):
    h = _gelu_tanh(x.astype(jnp.float32) @ w1.astype(jnp.float32)
                   + b1.astype(jnp.float32))
    y = h @ w2.astype(jnp.float32) + b2.astype(jnp.float32)
    return y.astype(x.dtype)


if __name__ == "__main__":
    key = jax.random.PRNGKey(0)
    k_x, k_1, k_2 = jax.random.split(key, 3)

    # Small but lane-friendly shapes (model_dim / ff_dim multiples of 128).
    batch, seq, model_dim, ff_dim = 2, 8, 128, 512

    x = jax.random.normal(k_x, (batch, seq, model_dim), jnp.float32)
    w1, b1 = _init_linear(k_1, model_dim, ff_dim)
    w2, b2 = _init_linear(k_2, ff_dim, model_dim)

    y_ref = _reference(x, w1, b1, w2, b2)

    # Weight-resident fast path (weights fit comfortably in VMEM).
    y = jax.block_until_ready(feed_forward(x, w1, b1, w2, b2))
    assert y.shape == (batch, seq, model_dim)
    assert jnp.allclose(y, y_ref, atol=1e-4, rtol=1e-4), "resident path mismatch"

    # Streamed fallback path (small ff tile -> 4 reduction steps over ff_dim).
    y_s = jax.block_until_ready(
        feed_forward(x, w1, b1, w2, b2, ff_tile=128, force_streamed=True))
    assert y_s.shape == (batch, seq, model_dim)
    assert jnp.allclose(y_s, y_ref, atol=1e-4, rtol=1e-4), "streamed path mismatch"

    print("KERNEL_OK")
</pallas_src>

<mosaic_0001>
module attributes {stable_mosaic.version = 11 : i64} {
  func.func @_ffn_resident_kernel(%arg0: i32, %arg1: memref<16x128xf32, #tpu.memory_space<vmem>>, %arg2: memref<128x512xf32, #tpu.memory_space<vmem>>, %arg3: memref<1x512xf32, #tpu.memory_space<vmem>>, %arg4: memref<512x128xf32, #tpu.memory_space<vmem>>, %arg5: memref<1x128xf32, #tpu.memory_space<vmem>>, %arg6: memref<16x128xf32, #tpu.memory_space<vmem>>) attributes {dimension_semantics = [#tpu.dimension_semantics<parallel>], iteration_bounds = array<i64: 1>, scalar_prefetch = 0 : i64, scratch_operands = 0 : i64, tpu.core_type = #tpu.core_type<tc>, window_params = [{transform_indices = @transform_0, window_bounds = array<i64: 16, 128>}, {pipeline_mode = #tpu.pipeline_mode<synchronous>, transform_indices = @transform_1, window_bounds = array<i64: 128, 512>}, {pipeline_mode = #tpu.pipeline_mode<synchronous>, transform_indices = @transform_2, window_bounds = array<i64: 1, 512>}, {pipeline_mode = #tpu.pipeline_mode<synchronous>, transform_indices = @transform_3, window_bounds = array<i64: 512, 128>}, {pipeline_mode = #tpu.pipeline_mode<synchronous>, transform_indices = @transform_4, window_bounds = array<i64: 1, 128>}, {transform_indices = @transform_5, window_bounds = array<i64: 16, 128>}]} {
    %c0 = arith.constant 0 : index
    %c0_0 = arith.constant 0 : index
    %0 = vector.load %arg1[%c0, %c0_0] : memref<16x128xf32, #tpu.memory_space<vmem>>, vector<16x128xf32>
    %c0_1 = arith.constant 0 : index
    %c0_2 = arith.constant 0 : index
    %1 = vector.load %arg2[%c0_1, %c0_2] : memref<128x512xf32, #tpu.memory_space<vmem>>, vector<128x512xf32>
    %cst = arith.constant dense<0.000000e+00> : vector<16x512xf32>
    %2 = tpu.matmul %0, %1, %cst {dimension_numbers = #tpu.dot_dimension_numbers<[1], [0], [0], [1], [0, 0, 1, 1], [], []>} : vector<16x128xf32>, vector<128x512xf32>, vector<16x512xf32> -> vector<16x512xf32>
    %c0_3 = arith.constant 0 : index
    %c0_4 = arith.constant 0 : index
    %3 = vector.load %arg3[%c0_3, %c0_4] : memref<1x512xf32, #tpu.memory_space<vmem>>, vector<1x512xf32>
    %4 = vector.broadcast %3 : vector<1x512xf32> to vector<16x512xf32>
    %5 = arith.addf %2, %4 : vector<16x512xf32>
    %cst_5 = arith.constant 5.000000e-01 : f32
    %6 = vector.broadcast %cst_5 : f32 to vector<16x512xf32>
    %7 = arith.mulf %6, %5 : vector<16x512xf32>
    %8 = arith.mulf %5, %5 : vector<16x512xf32>
    %cst_6 = arith.constant 4.471500e-02 : f32
    %9 = vector.broadcast %cst_6 : f32 to vector<16x512xf32>
    %10 = arith.mulf %9, %8 : vector<16x512xf32>
    %cst_7 = arith.constant 1.000000e+00 : f32
    %11 = vector.broadcast %cst_7 : f32 to vector<16x512xf32>
    %12 = arith.addf %11, %10 : vector<16x512xf32>
    %13 = arith.mulf %5, %12 : vector<16x512xf32>
    %cst_8 = arith.constant 0.797884583 : f32
    %14 = vector.broadcast %cst_8 : f32 to vector<16x512xf32>
    %15 = arith.mulf %14, %13 : vector<16x512xf32>
    %16 = math.tanh %15 : vector<16x512xf32>
    %cst_9 = arith.constant 1.000000e+00 : f32
    %17 = vector.broadcast %cst_9 : f32 to vector<16x512xf32>
    %18 = arith.addf %17, %16 : vector<16x512xf32>
    %19 = arith.mulf %7, %18 : vector<16x512xf32>
    %c0_10 = arith.constant 0 : index
    %c0_11 = arith.constant 0 : index
    %20 = vector.load %arg4[%c0_10, %c0_11] : memref<512x128xf32, #tpu.memory_space<vmem>>, vector<512x128xf32>
    %cst_12 = arith.constant dense<0.000000e+00> : vector<16x128xf32>
    %21 = tpu.matmul %19, %20, %cst_12 {dimension_numbers = #tpu.dot_dimension_numbers<[1], [0], [0], [1], [0, 0, 1, 1], [], []>} : vector<16x512xf32>, vector<512x128xf32>, vector<16x128xf32> -> vector<16x128xf32>
    %c0_13 = arith.constant 0 : index
    %c0_14 = arith.constant 0 : index
    %22 = vector.load %arg5[%c0_13, %c0_14] : memref<1x128xf32, #tpu.memory_space<vmem>>, vector<1x128xf32>
    %23 = vector.broadcast %22 : vector<1x128xf32> to vector<16x128xf32>
    %24 = arith.addf %21, %23 : vector<16x128xf32>
    %c0_15 = arith.constant 0 : index
    %c0_16 = arith.constant 0 : index
    %25 = vector.load %arg6[%c0_15, %c0_16] : memref<16x128xf32, #tpu.memory_space<vmem>>, vector<16x128xf32>
    tpu.vector_store %arg6[%c0_15, %c0_16], %24 {strides = array<i32>} : memref<16x128xf32, #tpu.memory_space<vmem>>, vector<16x128xf32>,
    return
  }
  func.func @transform_0(%arg0: i32) -> (i32, i32) {
    %c0_i32 = arith.constant 0 : i32
    %c0_i32_0 = arith.constant 0 : i32
    return %arg0, %c0_i32 : i32, i32
  }
  func.func @transform_1(%arg0: i32) -> (i32, i32) {
    %c0_i32 = arith.constant 0 : i32
    %c0_i32_0 = arith.constant 0 : i32
    %c0_i32_1 = arith.constant 0 : i32
    return %c0_i32, %c0_i32_0 : i32, i32
  }
  func.func @transform_2(%arg0: i32) -> (i32, i32) {
    %c0_i32 = arith.constant 0 : i32
    %c0_i32_0 = arith.constant 0 : i32
    %c0_i32_1 = arith.constant 0 : i32
    return %c0_i32, %c0_i32_0 : i32, i32
  }
  func.func @transform_3(%arg0: i32) -> (i32, i32) {
    %c0_i32 = arith.constant 0 : i32
    %c0_i32_0 = arith.constant 0 : i32
    %c0_i32_1 = arith.constant 0 : i32
    return %c0_i32, %c0_i32_0 : i32, i32
  }
  func.func @transform_4(%arg0: i32) -> (i32, i32) {
    %c0_i32 = arith.constant 0 : i32
    %c0_i32_0 = arith.constant 0 : i32
    %c0_i32_1 = arith.constant 0 : i32
    return %c0_i32, %c0_i32_0 : i32, i32
  }
  func.func @transform_5(%arg0: i32) -> (i32, i32) {
    %c0_i32 = arith.constant 0 : i32
    %c0_i32_0 = arith.constant 0 : i32
    return %arg0, %c0_i32 : i32, i32
  }
}

</mosaic_0001>

<llo_original>
// kernel: feed_forward.1
$region0: #{feed_forward.1}
  #allocation0 [shape = 'u32[]', space=smem, size = 0x4, offset = 0x4, fixed_abs, tag = 'smem constant byte address 0x4 - core index']
  #allocation1 [shape = 'u32[144,128]{1,0:T(1,128)}', space=vmem, size = 0x12000, scoped, tag = 'internal scratch']
  %s0 = inlined_call_operand.hbm [shape: f32[16,128], index: 0, kind: input, shape index: {}]
  %s1 = inlined_call_operand.hbm [shape: f32[128,512], index: 1, kind: input, shape index: {}]
  %s2 = inlined_call_operand.vmem [shape: f32[1,512], index: 2, kind: input, shape index: {}]
  %s3 = inlined_call_operand.hbm [shape: f32[512,128], index: 3, kind: input, shape index: {}]
  %s4 = inlined_call_operand.vmem [shape: f32[1,128], index: 4, kind: input, shape index: {}]
  %s5 = inlined_call_operand.hbm [shape: f32[16,128], index: 5, kind: output, shape index: {}]
  %s6 = sld [smem:[#allocation0]]
  $region42: #{feed_forward.1} parent=0
    _
  %s8 = ssub.s32 1, %s6
  %s9 = scalar_select 0, %s8, %s6
  $region1: #{feed_forward.1} parent=0
    #allocation2 [shape = 'u8[8192]{0}', space=vmem, size = 0x2000, scoped, tag = 'input window, operand 0, single buffered']
    #allocation3 [shape = 's32[1]{0}', space=sflag, size = 0x4, scoped, tag = 'scoped memory for feed_forward.1']
    #allocation4 [shape = 's32[1]{0}', space=sflag, size = 0x4, scoped, tag = 'scoped memory for feed_forward.1']
    #allocation5 [shape = 'u8[262144]{0}', space=vmem, size = 0x40000, scoped, tag = 'input window, operand 1, single buffered']
    #allocation6 [shape = 's32[1]{0}', space=sflag, size = 0x4, scoped, tag = 'scoped memory for feed_forward.1']
    #allocation7 [shape = 'u8[262144]{0}', space=vmem, size = 0x40000, scoped, tag = 'input window, operand 3, single buffered']
    #allocation8 [shape = 'u8[8192]{0}', space=vmem, size = 0x2000, scoped, tag = 'output window, operand 0, single buffered']
    %10 = vsyncpa [#allocation3], 0
    %11 = vsyncpa [#allocation6], 0
    %12 = vsyncpa [#allocation4], 0
    // Predicated region
    $region2: #{feed_forward.1} parent=1 // pred_check
      _
    $region3: #{feed_forward.1} parent=1 // pred_check_branch
      %14 = sbr.rel (0) target = $region5
    $region4: #{feed_forward.1} parent=1 // pred_region
      %s16 = ssub.s32 256, 256
      %17 = vsyncadd [#allocation3], %s16
      %s18 = sshll.u32 [#allocation2], 4
      %s19 = int_to_ptr.vmem [resolvable:$true] %s18
      %24 = dma.hbm_to_vmem [thread:$0]  %s0, 256, %s19, [#allocation3], 128, 128, 8
    $region5: #{feed_forward.1} parent=1 // pred_fallthru
      _
    // Predicated region
    $region6: #{feed_forward.1} parent=1 // pred_check
      _
    $region7: #{feed_forward.1} parent=1 // pred_check_branch
      %26 = sbr.rel (0) target = $region9
    $region8: #{feed_forward.1} parent=1 // pred_region
      %s28 = ssub.s32 8192, 8192
      %29 = vsyncadd [#allocation6], %s28
      %s30 = sshll.u32 [#allocation5], 4
      %s31 = int_to_ptr.vmem [resolvable:$true] %s30
      %36 = dma.hbm_to_vmem [thread:$0]  %s1, 8192, %s31, [#allocation6], 512, 512, 32
    $region9: #{feed_forward.1} parent=1 // pred_fallthru
      _
    // Predicated region
    $region10: #{feed_forward.1} parent=1 // pred_check
      _
    $region11: #{feed_forward.1} parent=1 // pred_check_branch
      %38 = sbr.rel (0) target = $region13
    $region12: #{feed_forward.1} parent=1 // pred_region
      _
    $region13: #{feed_forward.1} parent=1 // pred_fallthru
      _
    // Predicated region
    $region14: #{feed_forward.1} parent=1 // pred_check
      _
    $region15: #{feed_forward.1} parent=1 // pred_check_branch
      %40 = sbr.rel (0) target = $region17
    $region16: #{feed_forward.1} parent=1 // pred_region
      %s42 = ssub.s32 8192, 8192
      %43 = vsyncadd [#allocation6], %s42
      %s44 = sshll.u32 [#allocation7], 4
      %s45 = int_to_ptr.vmem [resolvable:$true] %s44
      %50 = dma.hbm_to_vmem [thread:$0]  %s3, 8192, %s45, [#allocation6], 128, 128, 8
    $region17: #{feed_forward.1} parent=1 // pred_fallthru
      _
    // Predicated region
    $region18: #{feed_forward.1} parent=1 // pred_check
      _
    $region19: #{feed_forward.1} parent=1 // pred_check_branch
      %52 = sbr.rel (0) target = $region21
    $region20: #{feed_forward.1} parent=1 // pred_region
      _
    $region21: #{feed_forward.1} parent=1 // pred_fallthru
      _
    // Predicated region
    $region22: #{feed_forward.1} parent=1 // pred_check
      _
    $region23: #{feed_forward.1} parent=1 // pred_check_branch
      %54 = sbr.rel (0) target = $region25
    $region24: #{feed_forward.1} parent=1 // pred_region
      %55 = dma.done [#allocation3], 256
    $region25: #{feed_forward.1} parent=1 // pred_fallthru
      _
    // Predicated region
    $region26: #{feed_forward.1} parent=1 // pred_check
      _
    $region27: #{feed_forward.1} parent=1 // pred_check_branch
      %57 = sbr.rel (0) target = $region29
    $region28: #{feed_forward.1} parent=1 // pred_region
      %58 = dma.done [#allocation6], 8192
    $region29: #{feed_forward.1} parent=1 // pred_fallthru
      _
    // Predicated region
    $region30: #{feed_forward.1} parent=1 // pred_check
      _
    $region31: #{feed_forward.1} parent=1 // pred_check_branch
      %60 = sbr.rel (0) target = $region33
    $region32: #{feed_forward.1} parent=1 // pred_region
      %61 = dma.done [#allocation6], 8192
    $region33: #{feed_forward.1} parent=1 // pred_fallthru
      _
    %v62 = vld [vmem:[#allocation2] sm:$0xff]
    %v63 = vld [vmem:[#allocation2 + $0x8] sm:$0xff]
    %v64 = vld [vmem:[#allocation5] sm:$0xff]
    %v65 = vld [vmem:[#allocation5 + $0x8] sm:$0xff]
    %v66 = vld [vmem:[#allocation5 + $0x10] sm:$0xff]
    %v67 = vld [vmem:[#allocation5 + $0x18] sm:$0xff]
    %v68 = vld [vmem:[#allocation5 + $0x20] sm:$0xff]
    %v69 = vld [vmem:[#allocation5 + $0x28] sm:$0xff]
    %v70 = vld [vmem:[#allocation5 + $0x30] sm:$0xff]
    %v71 = vld [vmem:[#allocation5 + $0x38] sm:$0xff]
    %v72 = vld [vmem:[#allocation5 + $0x40] sm:$0xff]
    %v73 = vld [vmem:[#allocation5 + $0x48] sm:$0xff]
    %v74 = vld [vmem:[#allocation5 + $0x50] sm:$0xff]
    %v75 = vld [vmem:[#allocation5 + $0x58] sm:$0xff]
    %v76 = vld [vmem:[#allocation5 + $0x60] sm:$0xff]
    %v77 = vld [vmem:[#allocation5 + $0x68] sm:$0xff]
    %v78 = vld [vmem:[#allocation5 + $0x70] sm:$0xff]
    %v79 = vld [vmem:[#allocation5 + $0x78] sm:$0xff]
    %v80 = vld [vmem:[#allocation5 + $0x80] sm:$0xff]
    %v81 = vld [vmem:[#allocation5 + $0x88] sm:$0xff]
    %v82 = vld [vmem:[#allocation5 + $0x90] sm:$0xff]
    %v83 = vld [vmem:[#allocation5 + $0x98] sm:$0xff]
    %v84 = vld [vmem:[#allocation5 + $0xa0] sm:$0xff]
    %v85 = vld [vmem:[#allocation5 + $0xa8] sm:$0xff]
    %v86 = vld [vmem:[#allocation5 + $0xb0] sm:$0xff]
    %v87 = vld [vmem:[#allocation5 + $0xb8] sm:$0xff]
    %v88 = vld [vmem:[#allocation5 + $0xc0] sm:$0xff]
    %v89 = vld [vmem:[#allocation5 + $0xc8] sm:$0xff]
    %v90 = vld [vmem:[#allocation5 + $0xd0] sm:$0xff]
    %v91 = vld [vmem:[#allocation5 + $0xd8] sm:$0xff]
    %v92 = vld [vmem:[#allocation5 + $0xe0] sm:$0xff]
    %v93 = vld [vmem:[#allocation5 + $0xe8] sm:$0xff]
    %v94 = vld [vmem:[#allocation5 + $0xf0] sm:$0xff]
    %v95 = vld [vmem:[#allocation5 + $0xf8] sm:$0xff]
    %v96 = vld [vmem:[#allocation5 + $0x100] sm:$0xff]
    %v97 = vld [vmem:[#allocation5 + $0x108] sm:$0xff]
    %v98 = vld [vmem:[#allocation5 + $0x110] sm:$0xff]
    %v99 = vld [vmem:[#allocation5 + $0x118] sm:$0xff]
    %v100 = vld [vmem:[#allocation5 + $0x120] sm:$0xff]
    %v101 = vld [vmem:[#allocation5 + $0x128] sm:$0xff]
    %v102 = vld [vmem:[#allocation5 + $0x130] sm:$0xff]
    %v103 = vld [vmem:[#allocation5 + $0x138] sm:$0xff]
    %v104 = vld [vmem:[#allocation5 + $0x140] sm:$0xff]
    %v105 = vld [vmem:[#allocation5 + $0x148] sm:$0xff]
    %v106 = vld [vmem:[#allocation5 + $0x150] sm:$0xff]
    %v107 = vld [vmem:[#allocation5 + $0x158] sm:$0xff]
    %v108 = vld [vmem:[#allocation5 + $0x160] sm:$0xff]
    %v109 = vld [vmem:[#allocation5 + $0x168] sm:$0xff]
    %v110 = vld [vmem:[#allocation5 + $0x170] sm:$0xff]
    %v111 = vld [vmem:[#allocation5 + $0x178] sm:$0xff]
    %v112 = vld [vmem:[#allocation5 + $0x180] sm:$0xff]
    %v113 = vld [vmem:[#allocation5 + $0x188] sm:$0xff]
    %v114 = vld [vmem:[#allocation5 + $0x190] sm:$0xff]
    %v115 = vld [vmem:[#allocation5 + $0x198] sm:$0xff]
    %v116 = vld [vmem:[#allocation5 + $0x1a0] sm:$0xff]
    %v117 = vld [vmem:[#allocation5 + $0x1a8] sm:$0xff]
    %v118 = vld [vmem:[#allocation5 + $0x1b0] sm:$0xff]
    %v119 = vld [vmem:[#allocation5 + $0x1b8] sm:$0xff]
    %v120 = vld [vmem:[#allocation5 + $0x1c0] sm:$0xff]
    %v121 = vld [vmem:[#allocation5 + $0x1c8] sm:$0xff]
    %v122 = vld [vmem:[#allocation5 + $0x1d0] sm:$0xff]
    %v123 = vld [vmem:[#allocation5 + $0x1d8] sm:$0xff]
    %v124 = vld [vmem:[#allocation5 + $0x1e0] sm:$0xff]
    %v125 = vld [vmem:[#allocation5 + $0x1e8] sm:$0xff]
    %v126 = vld [vmem:[#allocation5 + $0x1f0] sm:$0xff]
    %v127 = vld [vmem:[#allocation5 + $0x1f8] sm:$0xff]
    %v128 = vld [vmem:[%s2] sm:$0xf]
    %v130 = vlaneseq
    %v131 = vshrl.u32 %v130, 7
    %v132 = vsub.s32 0, %v131
    %v133 = vrot.slane %v128, %v132
    %v134 = vlaneseq
    %v135 = vshrl.u32 %v134, 7
    %v136 = vsub.s32 1, %v135
    %v137 = vrot.slane %v128, %v136
    %v138 = vlaneseq
    %v139 = vshrl.u32 %v138, 7
    %v140 = vsub.s32 2, %v139
    %v141 = vrot.slane %v128, %v140
    %v142 = vlaneseq
    %v143 = vshrl.u32 %v142, 7
    %v144 = vsub.s32 3, %v143
    %v145 = vrot.slane %v128, %v144
    %150 = vmatprep.subr.mxu0 %v65
    %151 = vmatpush1.msra.mxu0 %v64
    %152 = vmatprep.subr.mxu0 %v69
    %153 = vmatpush1.msra.mxu0 %v68
    %154 = vmatprep.subr.mxu0 %v73
    %155 = vmatpush1.msra.mxu0 %v72
    %156 = vmatprep.subr.mxu0 %v77
    %157 = vmatpush1.msra.mxu0 %v76
    %158 = vmatprep.subr.mxu0 %v81
    %159 = vmatpush1.msra.mxu0 %v80
    %160 = vmatprep.subr.mxu0 %v85
    %161 = vmatpush1.msra.mxu0 %v84
    %162 = vmatprep.subr.mxu0 %v89
    %163 = vmatpush1.msra.mxu0 %v88
    %164 = vmatprep.subr.mxu0 %v93
    %165 = vmatpush1.msra.mxu0 %v92
    %166 = vmatprep.subr.mxu0 %v97
    %167 = vmatpush1.msra.mxu0 %v96
    %168 = vmatprep.subr.mxu0 %v101
    %169 = vmatpush1.msra.mxu0 %v100
    %170 = vmatprep.subr.mxu0 %v105
    %171 = vmatpush1.msra.mxu0 %v104
    %172 = vmatprep.subr.mxu0 %v109
    %173 = vmatpush1.msra.mxu0 %v108
    %174 = vmatprep.subr.mxu0 %v113
    %175 = vmatpush1.msra.mxu0 %v112
    %176 = vmatprep.subr.mxu0 %v117
    %177 = vmatpush1.msra.mxu0 %v116
    %178 = vmatprep.subr.mxu0 %v121
    %179 = vmatpush1.msra.mxu0 %v120
    %180 = vmatprep.subr.mxu0 %v125
    %181 = vmatpush1.msra.mxu0 %v124
    %182 = vmatprep.subr.mxu0 0.0
    %183 = vmatpush1.msra.mxu0 0.0
    %184 = vmatprep.subr.mxu0 0.0
    %185 = vmatpush1.msra.mxu0 0.0
    %186 = vmatprep.subr.mxu0 0.0
    %187 = vmatpush1.msra.mxu0 0.0
    %188 = vmatprep.subr.mxu0 0.0
    %189 = vmatpush1.msra.mxu0 0.0
    %190 = vmatprep.subr.mxu0 0.0
    %191 = vmatpush1.msra.mxu0 0.0
    %192 = vmatprep.subr.mxu0 0.0
    %193 = vmatpush1.msra.mxu0 0.0
    %194 = vmatprep.subr.mxu0 0.0
    %195 = vmatpush1.msra.mxu0 0.0
    %196 = vmatprep.subr.mxu0 0.0
    %197 = vmatpush1.msra.mxu0 0.0
    %198 = vmatprep.subr.mxu0 0.0
    %199 = vmatpush1.msra.mxu0 0.0
    %200 = vmatprep.subr.mxu0 0.0
    %201 = vmatpush1.msra.mxu0 0.0
    %202 = vmatprep.subr.mxu0 0.0
    %203 = vmatpush1.msra.mxu0 0.0
    %204 = vmatprep.subr.mxu0 0.0
    %205 = vmatpush1.msra.mxu0 0.0
    %206 = vmatprep.subr.mxu0 0.0
    %207 = vmatpush1.msra.mxu0 0.0
    %208 = vmatprep.subr.mxu0 0.0
    %209 = vmatpush1.msra.mxu0 0.0
    %210 = vmatprep.subr.mxu0 0.0
    %211 = vmatpush1.msra.mxu0 0.0
    %212 = vmatprep.subr.mxu0 0.0
    %213 = vmatpush1.msra.mxu0 0.0
    %214 = vmatprep.mubr.f32.mxu0 0.0
    %215 = vmatmul.mubr.f32.gmra.mrb[0].mxu0 %v62
    %v216 = vpop.f32.mrb[0].mxu0
    %v217 = vadd.f32 %v133, %v216
    %v218 = vpop.f32.mrb[0].mxu0
    %v219 = vadd.f32 %v137, %v218
    %220 = vmatprep.mubr.f32.mxu0 0.0
    %221 = vmatmul.mubr.f32.gmra.mrb[0].mxu0 %v63
    %v222 = vpop.f32.mrb[0].mxu0
    %v223 = vadd.f32 %v133, %v222
    %v224 = vpop.f32.mrb[0].mxu0
    %v225 = vadd.f32 %v137, %v224
    %226 = vdwg.mxu0
    %227 = vmatprep.subr.mxu0 %v67
    %228 = vmatpush1.msra.mxu0 %v66
    %229 = vmatprep.subr.mxu0 %v71
    %230 = vmatpush1.msra.mxu0 %v70
    %231 = vmatprep.subr.mxu0 %v75
    %232 = vmatpush1.msra.mxu0 %v74
    %233 = vmatprep.subr.mxu0 %v79
    %234 = vmatpush1.msra.mxu0 %v78
    %235 = vmatprep.subr.mxu0 %v83
    %236 = vmatpush1.msra.mxu0 %v82
    %237 = vmatprep.subr.mxu0 %v87
    %238 = vmatpush1.msra.mxu0 %v86
    %239 = vmatprep.subr.mxu0 %v91
    %240 = vmatpush1.msra.mxu0 %v90
    %241 = vmatprep.subr.mxu0 %v95
    %242 = vmatpush1.msra.mxu0 %v94
    %243 = vmatprep.subr.mxu0 %v99
    %244 = vmatpush1.msra.mxu0 %v98
    %245 = vmatprep.subr.mxu0 %v103
    %246 = vmatpush1.msra.mxu0 %v102
    %247 = vmatprep.subr.mxu0 %v107
    %248 = vmatpush1.msra.mxu0 %v106
    %249 = vmatprep.subr.mxu0 %v111
    %250 = vmatpush1.msra.mxu0 %v110
    %251 = vmatprep.subr.mxu0 %v115
    %252 = vmatpush1.msra.mxu0 %v114
    %253 = vmatprep.subr.mxu0 %v119
    %254 = vmatpush1.msra.mxu0 %v118
    %255 = vmatprep.subr.mxu0 %v123
    %256 = vmatpush1.msra.mxu0 %v122
    %257 = vmatprep.subr.mxu0 %v127
    %258 = vmatpush1.msra.mxu0 %v126
    %259 = vmatprep.subr.mxu0 0.0
    %260 = vmatpush1.msra.mxu0 0.0
    %261 = vmatprep.subr.mxu0 0.0
    %262 = vmatpush1.msra.mxu0 0.0
    %263 = vmatprep.subr.mxu0 0.0
    %264 = vmatpush1.msra.mxu0 0.0
    %265 = vmatprep.subr.mxu0 0.0
    %266 = vmatpush1.msra.mxu0 0.0
    %267 = vmatprep.subr.mxu0 0.0
    %268 = vmatpush1.msra.mxu0 0.0
    %269 = vmatprep.subr.mxu0 0.0
    %270 = vmatpush1.msra.mxu0 0.0
    %271 = vmatprep.subr.mxu0 0.0
    %272 = vmatpush1.msra.mxu0 0.0
    %273 = vmatprep.subr.mxu0 0.0
    %274 = vmatpush1.msra.mxu0 0.0
    %275 = vmatprep.subr.mxu0 0.0
    %276 = vmatpush1.msra.mxu0 0.0
    %277 = vmatprep.subr.mxu0 0.0
    %278 = vmatpush1.msra.mxu0 0.0
    %279 = vmatprep.subr.mxu0 0.0
    %280 = vmatpush1.msra.mxu0 0.0
    %281 = vmatprep.subr.mxu0 0.0
    %282 = vmatpush1.msra.mxu0 0.0
    %283 = vmatprep.subr.mxu0 0.0
    %284 = vmatpush1.msra.mxu0 0.0
    %285 = vmatprep.subr.mxu0 0.0
    %286 = vmatpush1.msra.mxu0 0.0
    %287 = vmatprep.subr.mxu0 0.0
    %288 = vmatpush1.msra.mxu0 0.0
    %289 = vmatprep.subr.mxu0 0.0
    %290 = vmatpush1.msra.mxu0 0.0
    %291 = vmatprep.mubr.f32.mxu0 0.0
    %292 = vmatmul.mubr.f32.gmra.mrb[0].mxu0 %v62
    %v293 = vpop.f32.mrb[0].mxu0
    %v294 = vadd.f32 %v141, %v293
    %v295 = vpop.f32.mrb[0].mxu0
    %v296 = vadd.f32 %v145, %v295
    %297 = vmatprep.mubr.f32.mxu0 0.0
    %298 = vmatmul.mubr.f32.gmra.mrb[0].mxu0 %v63
    %v299 = vpop.f32.mrb[0].mxu0
    %v300 = vadd.f32 %v141, %v299
    %v301 = vpop.f32.mrb[0].mxu0
    %v302 = vadd.f32 %v145, %v301
    %303 = vdwg.mxu0
    %v304 = vmul.f32 %v217, 0.5
    %v305 = vmul.f32 %v219, 0.5
    %v306 = vmul.f32 %v294, 0.5
    %v307 = vmul.f32 %v296, 0.5
    %v308 = vmul.f32 %v223, 0.5
    %v309 = vmul.f32 %v225, 0.5
    %v310 = vmul.f32 %v300, 0.5
    %v311 = vmul.f32 %v302, 0.5
    %v312 = vmul.f32 %v217, %v217
    %v313 = vmul.f32 %v219, %v219
    %v314 = vmul.f32 %v294, %v294
    %v315 = vmul.f32 %v296, %v296
    %v316 = vmul.f32 %v223, %v223
    %v317 = vmul.f32 %v225, %v225
    %v318 = vmul.f32 %v300, %v300
    %v319 = vmul.f32 %v302, %v302
    %v320 = vmul.f32 %v312, 0.044715
    %v321 = vmul.f32 %v313, 0.044715
    %v322 = vmul.f32 %v314, 0.044715
    %v323 = vmul.f32 %v315, 0.044715
    %v324 = vmul.f32 %v316, 0.044715
    %v325 = vmul.f32 %v317, 0.044715
    %v326 = vmul.f32 %v318, 0.044715
    %v327 = vmul.f32 %v319, 0.044715
    %v328 = vadd.f32 %v320, 1.0
    %v329 = vadd.f32 %v321, 1.0
    %v330 = vadd.f32 %v322, 1.0
    %v331 = vadd.f32 %v323, 1.0
    %v332 = vadd.f32 %v324, 1.0
    %v333 = vadd.f32 %v325, 1.0
    %v334 = vadd.f32 %v326, 1.0
    %v335 = vadd.f32 %v327, 1.0
    %v336 = vmul.f32 %v217, %v328
    %v337 = vmul.f32 %v219, %v329
    %v338 = vmul.f32 %v294, %v330
    %v339 = vmul.f32 %v296, %v331
    %v340 = vmul.f32 %v223, %v332
    %v341 = vmul.f32 %v225, %v333
    %v342 = vmul.f32 %v300, %v334
    %v343 = vmul.f32 %v302, %v335
    %v344 = vmul.f32 %v336, 0.7978846
    %v345 = vmul.f32 %v337, 0.7978846
    %v346 = vmul.f32 %v338, 0.7978846
    %v347 = vmul.f32 %v339, 0.7978846
    %v348 = vmul.f32 %v340, 0.7978846
    %v349 = vmul.f32 %v341, 0.7978846
    %v350 = vmul.f32 %v342, 0.7978846
    %v351 = vmul.f32 %v343, 0.7978846
    %v352 = vtanh.pop %v344
    %v353 = vtanh.pop %v345
    %v354 = vtanh.pop %v346
    %v355 = vtanh.pop %v347
    %v356 = vtanh.pop %v348
    %v357 = vtanh.pop %v349
    %v358 = vtanh.pop %v350
    %v359 = vtanh.pop %v351
    %v360 = vadd.f32 %v352, 1.0
    %v361 = vadd.f32 %v353, 1.0
    %v362 = vadd.f32 %v354, 1.0
    %v363 = vadd.f32 %v355, 1.0
    %v364 = vadd.f32 %v356, 1.0
    %v365 = vadd.f32 %v357, 1.0
    %v366 = vadd.f32 %v358, 1.0
    %v367 = vadd.f32 %v359, 1.0
    %v368 = vmul.f32 %v304, %v360
    %v369 = vmul.f32 %v305, %v361
    %v370 = vmul.f32 %v306, %v362
    %v371 = vmul.f32 %v307, %v363
    %v372 = vmul.f32 %v308, %v364
    %v373 = vmul.f32 %v309, %v365
    %v374 = vmul.f32 %v310, %v366
    %v375 = vmul.f32 %v311, %v367
    %v376 = vld [vmem:[#allocation7] sm:$0xff]
    %v377 = vld [vmem:[#allocation7 + $0x8] sm:$0xff]
    %v378 = vld [vmem:[#allocation7 + $0x10] sm:$0xff]
    %v379 = vld [vmem:[#allocation7 + $0x18] sm:$0xff]
    %v380 = vld [vmem:[#allocation7 + $0x20] sm:$0xff]
    %v381 = vld [vmem:[#allocation7 + $0x28] sm:$0xff]
    %v382 = vld [vmem:[#allocation7 + $0x30] sm:$0xff]
    %v383 = vld [vmem:[#allocation7 + $0x38] sm:$0xff]
    %v384 = vld [vmem:[#allocation7 + $0x40] sm:$0xff]
    %v385 = vld [vmem:[#allocation7 + $0x48] sm:$0xff]
    %v386 = vld [vmem:[#allocation7 + $0x50] sm:$0xff]
    %v387 = vld [vmem:[#allocation7 + $0x58] sm:$0xff]
    %v388 = vld [vmem:[#allocation7 + $0x60] sm:$0xff]
    %v389 = vld [vmem:[#allocation7 + $0x68] sm:$0xff]
    %v390 = vld [vmem:[#allocation7 + $0x70] sm:$0xff]
    %v391 = vld [vmem:[#allocation7 + $0x78] sm:$0xff]
    %v392 = vld [vmem:[#allocation7 + $0x80] sm:$0xff]
    %v393 = vld [vmem:[#allocation7 + $0x88] sm:$0xff]
    %v394 = vld [vmem:[#allocation7 + $0x90] sm:$0xff]
    %v395 = vld [vmem:[#allocation7 + $0x98] sm:$0xff]
    %v396 = vld [vmem:[#allocation7 + $0xa0] sm:$0xff]
    %v397 = vld [vmem:[#allocation7 + $0xa8] sm:$0xff]
    %v398 = vld [vmem:[#allocation7 + $0xb0] sm:$0xff]
    %v399 = vld [vmem:[#allocation7 + $0xb8] sm:$0xff]
    %v400 = vld [vmem:[#allocation7 + $0xc0] sm:$0xff]
    %v401 = vld [vmem:[#allocation7 + $0xc8] sm:$0xff]
    %v402 = vld [vmem:[#allocation7 + $0xd0] sm:$0xff]
    %v403 = vld [vmem:[#allocation7 + $0xd8] sm:$0xff]
    %v404 = vld [vmem:[#allocation7 + $0xe0] sm:$0xff]
    %v405 = vld [vmem:[#allocation7 + $0xe8] sm:$0xff]
    %v406 = vld [vmem:[#allocation7 + $0xf0] sm:$0xff]
    %v407 = vld [vmem:[#allocation7 + $0xf8] sm:$0xff]
    %v408 = vld [vmem:[#allocation7 + $0x100] sm:$0xff]
    %v409 = vld [vmem:[#allocation7 + $0x108] sm:$0xff]
    %v410 = vld [vmem:[#allocation7 + $0x110] sm:$0xff]
    %v411 = vld [vmem:[#allocation7 + $0x118] sm:$0xff]
    %v412 = vld [vmem:[#allocation7 + $0x120] sm:$0xff]
    %v413 = vld [vmem:[#allocation7 + $0x128] sm:$0xff]
    %v414 = vld [vmem:[#allocation7 + $0x130] sm:$0xff]
    %v415 = vld [vmem:[#allocation7 + $0x138] sm:$0xff]
    %v416 = vld [vmem:[#allocation7 + $0x140] sm:$0xff]
    %v417 = vld [vmem:[#allocation7 + $0x148] sm:$0xff]
    %v418 = vld [vmem:[#allocation7 + $0x150] sm:$0xff]
    %v419 = vld [vmem:[#allocation7 + $0x158] sm:$0xff]
    %v420 = vld [vmem:[#allocation7 + $0x160] sm:$0xff]
    %v421 = vld [vmem:[#allocation7 + $0x168] sm:$0xff]
    %v422 = vld [vmem:[#allocation7 + $0x170] sm:$0xff]
    %v423 = vld [vmem:[#allocation7 + $0x178] sm:$0xff]
    %v424 = vld [vmem:[#allocation7 + $0x180] sm:$0xff]
    %v425 = vld [vmem:[#allocation7 + $0x188] sm:$0xff]
    %v426 = vld [vmem:[#allocation7 + $0x190] sm:$0xff]
    %v427 = vld [vmem:[#allocation7 + $0x198] sm:$0xff]
    %v428 = vld [vmem:[#allocation7 + $0x1a0] sm:$0xff]
    %v429 = vld [vmem:[#allocation7 + $0x1a8] sm:$0xff]
    %v430 = vld [vmem:[#allocation7 + $0x1b0] sm:$0xff]
    %v431 = vld [vmem:[#allocation7 + $0x1b8] sm:$0xff]
    %v432 = vld [vmem:[#allocation7 + $0x1c0] sm:$0xff]
    %v433 = vld [vmem:[#allocation7 + $0x1c8] sm:$0xff]
    %v434 = vld [vmem:[#allocation7 + $0x1d0] sm:$0xff]
    %v435 = vld [vmem:[#allocation7 + $0x1d8] sm:$0xff]
    %v436 = vld [vmem:[#allocation7 + $0x1e0] sm:$0xff]
    %v437 = vld [vmem:[#allocation7 + $0x1e8] sm:$0xff]
    %v438 = vld [vmem:[#allocation7 + $0x1f0] sm:$0xff]
    %v439 = vld [vmem:[#allocation7 + $0x1f8] sm:$0xff]
    %v440 = vld [vmem:[%s4] sm:$0x1]
    %v442 = vlaneseq
    %v443 = vshrl.u32 %v442, 7
    %v444 = vsub.s32 0, %v443
    %v445 = vrot.slane %v440, %v444
    %447 = vmatprep.subr.mxu0 0.0
    %448 = vmatpush1.msra.mxu0 %v376
    %449 = vmatprep.subr.mxu0 0.0
    %450 = vmatpush1.msra.mxu0 %v377
    %451 = vmatprep.subr.mxu0 0.0
    %452 = vmatpush1.msra.mxu0 %v378
    %453 = vmatprep.subr.mxu0 0.0
    %454 = vmatpush1.msra.mxu0 %v379
    %455 = vmatprep.subr.mxu0 0.0
    %456 = vmatpush1.msra.mxu0 %v380
    %457 = vmatprep.subr.mxu0 0.0
    %458 = vmatpush1.msra.mxu0 %v381
    %459 = vmatprep.subr.mxu0 0.0
    %460 = vmatpush1.msra.mxu0 %v382
    %461 = vmatprep.subr.mxu0 0.0
    %462 = vmatpush1.msra.mxu0 %v383
    %463 = vmatprep.subr.mxu0 0.0
    %464 = vmatpush1.msra.mxu0 %v384
    %465 = vmatprep.subr.mxu0 0.0
    %466 = vmatpush1.msra.mxu0 %v385
    %467 = vmatprep.subr.mxu0 0.0
    %468 = vmatpush1.msra.mxu0 %v386
    %469 = vmatprep.subr.mxu0 0.0
    %470 = vmatpush1.msra.mxu0 %v387
    %471 = vmatprep.subr.mxu0 0.0
    %472 = vmatpush1.msra.mxu0 %v388
    %473 = vmatprep.subr.mxu0 0.0
    %474 = vmatpush1.msra.mxu0 %v389
    %475 = vmatprep.subr.mxu0 0.0
    %476 = vmatpush1.msra.mxu0 %v390
    %477 = vmatprep.subr.mxu0 0.0
    %478 = vmatpush1.msra.mxu0 %v391
    %479 = vmatprep.subr.mxu0 0.0
    %480 = vmatpush1.msra.mxu0 %v392
    %481 = vmatprep.subr.mxu0 0.0
    %482 = vmatpush1.msra.mxu0 %v393
    %483 = vmatprep.subr.mxu0 0.0
    %484 = vmatpush1.msra.mxu0 %v394
    %485 = vmatprep.subr.mxu0 0.0
    %486 = vmatpush1.msra.mxu0 %v395
    %487 = vmatprep.subr.mxu0 0.0
    %488 = vmatpush1.msra.mxu0 %v396
    %489 = vmatprep.subr.mxu0 0.0
    %490 = vmatpush1.msra.mxu0 %v397
    %491 = vmatprep.subr.mxu0 0.0
    %492 = vmatpush1.msra.mxu0 %v398
    %493 = vmatprep.subr.mxu0 0.0
    %494 = vmatpush1.msra.mxu0 %v399
    %495 = vmatprep.subr.mxu0 0.0
    %496 = vmatpush1.msra.mxu0 %v400
    %497 = vmatprep.subr.mxu0 0.0
    %498 = vmatpush1.msra.mxu0 %v401
    %499 = vmatprep.subr.mxu0 0.0
    %500 = vmatpush1.msra.mxu0 %v402
    %501 = vmatprep.subr.mxu0 0.0
    %502 = vmatpush1.msra.mxu0 %v403
    %503 = vmatprep.subr.mxu0 0.0
    %504 = vmatpush1.msra.mxu0 %v404
    %505 = vmatprep.subr.mxu0 0.0
    %506 = vmatpush1.msra.mxu0 %v405
    %507 = vmatprep.subr.mxu0 0.0
    %508 = vmatpush1.msra.mxu0 %v406
    %509 = vmatprep.subr.mxu0 0.0
    %510 = vmatpush1.msra.mxu0 %v407
    %511 = vmatprep.mubr.f32.mxu0 %v369
    %512 = vmatmul.mubr.f32.gmra.mrb[0].mxu0 %v368
    %v513 = vpop.f32.mrb[0].mxu0
    %v514 = vadd.f32 %v445, %v513
    %v515 = vpop.f32.mrb[0].mxu0
    %516 = vmatprep.mubr.f32.mxu0 %v373
    %517 = vmatmul.mubr.f32.gmra.mrb[0].mxu0 %v372
    %v518 = vpop.f32.mrb[0].mxu0
    %v519 = vadd.f32 %v445, %v518
    %v520 = vpop.f32.mrb[0].mxu0
    %521 = vdwg.mxu0
    %522 = vmatprep.subr.mxu0 0.0
    %523 = vmatpush1.msra.mxu0 %v408
    %524 = vmatprep.subr.mxu0 0.0
    %525 = vmatpush1.msra.mxu0 %v409
    %526 = vmatprep.subr.mxu0 0.0
    %527 = vmatpush1.msra.mxu0 %v410
    %528 = vmatprep.subr.mxu0 0.0
    %529 = vmatpush1.msra.mxu0 %v411
    %530 = vmatprep.subr.mxu0 0.0
    %531 = vmatpush1.msra.mxu0 %v412
    %532 = vmatprep.subr.mxu0 0.0
    %533 = vmatpush1.msra.mxu0 %v413
    %534 = vmatprep.subr.mxu0 0.0
    %535 = vmatpush1.msra.mxu0 %v414
    %536 = vmatprep.subr.mxu0 0.0
    %537 = vmatpush1.msra.mxu0 %v415
    %538 = vmatprep.subr.mxu0 0.0
    %539 = vmatpush1.msra.mxu0 %v416
    %540 = vmatprep.subr.mxu0 0.0
    %541 = vmatpush1.msra.mxu0 %v417
    %542 = vmatprep.subr.mxu0 0.0
    %543 = vmatpush1.msra.mxu0 %v418
    %544 = vmatprep.subr.mxu0 0.0
    %545 = vmatpush1.msra.mxu0 %v419
    %546 = vmatprep.subr.mxu0 0.0
    %547 = vmatpush1.msra.mxu0 %v420
    %548 = vmatprep.subr.mxu0 0.0
    %549 = vmatpush1.msra.mxu0 %v421
    %550 = vmatprep.subr.mxu0 0.0
    %551 = vmatpush1.msra.mxu0 %v422
    %552 = vmatprep.subr.mxu0 0.0
    %553 = vmatpush1.msra.mxu0 %v423
    %554 = vmatprep.subr.mxu0 0.0
    %555 = vmatpush1.msra.mxu0 %v424
    %556 = vmatprep.subr.mxu0 0.0
    %557 = vmatpush1.msra.mxu0 %v425
    %558 = vmatprep.subr.mxu0 0.0
    %559 = vmatpush1.msra.mxu0 %v426
    %560 = vmatprep.subr.mxu0 0.0
    %561 = vmatpush1.msra.mxu0 %v427
    %562 = vmatprep.subr.mxu0 0.0
    %563 = vmatpush1.msra.mxu0 %v428
    %564 = vmatprep.subr.mxu0 0.0
    %565 = vmatpush1.msra.mxu0 %v429
    %566 = vmatprep.subr.mxu0 0.0
    %567 = vmatpush1.msra.mxu0 %v430
    %568 = vmatprep.subr.mxu0 0.0
    %569 = vmatpush1.msra.mxu0 %v431
    %570 = vmatprep.subr.mxu0 0.0
    %571 = vmatpush1.msra.mxu0 %v432
    %572 = vmatprep.subr.mxu0 0.0
    %573 = vmatpush1.msra.mxu0 %v433
    %574 = vmatprep.subr.mxu0 0.0
    %575 = vmatpush1.msra.mxu0 %v434
    %576 = vmatprep.subr.mxu0 0.0
    %577 = vmatpush1.msra.mxu0 %v435
    %578 = vmatprep.subr.mxu0 0.0
    %579 = vmatpush1.msra.mxu0 %v436
    %580 = vmatprep.subr.mxu0 0.0
    %581 = vmatpush1.msra.mxu0 %v437
    %582 = vmatprep.subr.mxu0 0.0
    %583 = vmatpush1.msra.mxu0 %v438
    %584 = vmatprep.subr.mxu0 0.0
    %585 = vmatpush1.msra.mxu0 %v439
    %586 = vmatprep.mubr.f32.mxu0 %v371
    %587 = vmatmul.mubr.f32.gmra.mrb[0].mxu0 %v370
    %v588 = vpop.f32.mrb[0].mxu0
    %v589 = vadd.f32 %v514, %v588
    %v590 = vpop.f32.mrb[0].mxu0
    %591 = vmatprep.mubr.f32.mxu0 %v375
    %592 = vmatmul.mubr.f32.gmra.mrb[0].mxu0 %v374
    %v593 = vpop.f32.mrb[0].mxu0
    %v594 = vadd.f32 %v519, %v593
    %v595 = vpop.f32.mrb[0].mxu0
    %596 = vdwg.mxu0
    %597 = vst [vmem:[#allocation8] sm:$0xff] %v589
    %598 = vst [vmem:[#allocation8 + $0x8] sm:$0xff] %v594
    // Predicated region
    $region34: #{feed_forward.1} parent=1 // pred_check
      _
    $region35: #{feed_forward.1} parent=1 // pred_check_branch
      %600 = sbr.rel (0) target = $region37
    $region36: #{feed_forward.1} parent=1 // pred_region
      %s602 = ssub.s32 256, 256
      %603 = vsyncadd [#allocation4], %s602
      %s604 = sshll.u32 [#allocation8], 4
      %s605 = int_to_ptr.vmem [resolvable:$true] %s604
      %610 = dma.vmem_to_hbm [thread:$0]  %s605, 256, %s5, [#allocation4], 128, 128, 8
    $region37: #{feed_forward.1} parent=1 // pred_fallthru
      _
    // Predicated region
    $region38: #{feed_forward.1} parent=1 // pred_check
      _
    $region39: #{feed_forward.1} parent=1 // pred_check_branch
      %612 = sbr.rel (0) target = $region41
    $region40: #{feed_forward.1} parent=1 // pred_region
      %613 = dma.done [#allocation4], 256
    $region41: #{feed_forward.1} parent=1 // pred_fallthru
      _
    %614 = vsyncpa [#allocation3], 1
    %615 = vsyncpa [#allocation6], 1
    %616 = vsyncpa [#allocation4], 1

</llo_original>
